<compile_context>
chip_gen: v7x
topology: tpu7x:2x2x1
jax: 0.10.0
libtpu: 0.0.40
codegen_flags: <defaults>
</compile_context>

<pallas_src>
import functools

import jax
import jax.numpy as jnp
from jax.experimental import pallas as pl
from jax.experimental.pallas import tpu as pltpu


def _berhu_kernel(pred_ref, gt_ref, out_ref, max_acc, sum_acc, cnt_acc, thr_sc,
                  *, scale, eps, rows, tile_rows, needs_mask):
    phase = pl.program_id(0)
    t = pl.program_id(1)
    nt = pl.num_programs(1)

    pred = pred_ref[...].astype(jnp.float32)
    gt = gt_ref[...].astype(jnp.float32)

    valid = gt > eps
    if needs_mask:
        # Last block extends past the array; its tail contents are undefined,
        # so exclude out-of-range rows explicitly.
        row = jax.lax.broadcasted_iota(jnp.int32, pred.shape, 0) + t * tile_rows
        valid = jnp.logical_and(valid, row < rows)
    diff = jnp.abs(pred - gt)

    # --- init accumulators on the very first grid step --------------------
    @pl.when(jnp.logical_and(phase == 0, t == 0))
    def _():
        max_acc[...] = jnp.zeros_like(max_acc)   # diff >= 0, so 0 is a safe identity
        sum_acc[...] = jnp.zeros_like(sum_acc)
        cnt_acc[...] = jnp.zeros_like(cnt_acc)

    # --- phase 0: per-lane max + per-lane valid count ----------------------
    @pl.when(phase == 0)
    def _():
        md = jnp.where(valid, diff, 0.0)
        max_acc[...] = jnp.maximum(max_acc[...],
                                   jnp.max(md, axis=0, keepdims=True))
        cnt_acc[...] += jnp.sum(valid.astype(jnp.int32), axis=0, keepdims=True)

    # tiny cross-lane reduction at the end of phase 0 -> scalar threshold
    @pl.when(jnp.logical_and(phase == 0, t == nt - 1))
    def _():
        thr_sc[0] = scale * jnp.max(max_acc[...])

    # --- phase 1: accumulate per-lane BerHu sums ----------------------------
    @pl.when(phase == 1)
    def _():
        thr = thr_sc[0]
        thr2 = thr * thr
        inv = 1.0 / (2.0 * thr + eps)            # scalar reciprocal, hoisted
        quad = (diff * diff + thr2) * inv
        val = jnp.where(diff > thr, quad, diff)
        val = jnp.where(valid, val, 0.0)
        sum_acc[...] += jnp.sum(val, axis=0, keepdims=True)

    # tiny cross-lane reduction + divide on the very last grid step
    @pl.when(jnp.logical_and(phase == 1, t == nt - 1))
    def _():
        total = jnp.sum(sum_acc[...])
        cnt = jnp.sum(cnt_acc[...]).astype(jnp.float32)
        out_ref[0] = total / cnt


def berhu_loss(pred, gt, scale=0.5, eps=1e-5, *, tile_rows=4096, lanes=128):
    assert pred.shape == gt.shape
    assert tile_rows % 8 == 0 and tile_rows >= 8
    n = pred.size

    # Flatten (free for contiguous arrays). Only pad the ragged lane tail
    # (< 128 elements) when needed; no full-array pad to tile granularity.
    flat_p = pred.reshape(-1)
    flat_g = gt.reshape(-1)
    rem = (-n) % lanes
    if rem:
        flat_p = jnp.pad(flat_p, (0, rem))
        flat_g = jnp.pad(flat_g, (0, rem))  # zero pad -> gt == 0 <= eps -> excluded
    rows = (n + rem) // lanes
    p2d = flat_p.reshape(rows, lanes)
    g2d = flat_g.reshape(rows, lanes)

    if rows <= tile_rows:
        # Single block equal to the full array: grid (2, 1); the block index
        # is identical in both phases so the data is only streamed once.
        tile = rows
        needs_mask = False
    else:
        tile = tile_rows
        needs_mask = (rows % tile != 0)
    num_tiles = pl.cdiv(rows, tile)

    kernel = functools.partial(
        _berhu_kernel,
        scale=float(scale), eps=float(eps),
        rows=rows, tile_rows=tile, needs_mask=needs_mask,
    )

    out = pl.pallas_call(
        kernel,
        out_shape=jax.ShapeDtypeStruct((1,), jnp.float32),
        grid_spec=pltpu.PrefetchScalarGridSpec(
            num_scalar_prefetch=0,
            grid=(2, num_tiles),  # (phase, tile)
            in_specs=[
                pl.BlockSpec((tile, lanes), lambda p, t: (t, 0)),
                pl.BlockSpec((tile, lanes), lambda p, t: (t, 0)),
            ],
            out_specs=pl.BlockSpec(memory_space=pltpu.SMEM),
            scratch_shapes=[
                pltpu.VMEM((1, lanes), jnp.float32),  # per-lane running max
                pltpu.VMEM((1, lanes), jnp.float32),  # per-lane running berhu sum
                pltpu.VMEM((1, lanes), jnp.int32),    # per-lane valid count (exact)
                pltpu.SMEM((1,), jnp.float32),        # threshold scalar
            ],
        ),
        compiler_params=pltpu.CompilerParams(
            dimension_semantics=("arbitrary", "arbitrary"),
        ),
    )(p2d, g2d)
    return out[0]


def _berhu_loss_ref(pred, gt, scale=0.5, eps=1e-5):
    # Pure-JAX reference of the PyTorch forward (for sanity checking).
    pred = pred.reshape(-1).astype(jnp.float32)
    gt = gt.reshape(-1).astype(jnp.float32)
    valid = gt > eps
    diff = jnp.abs(pred - gt)
    threshold = scale * jnp.max(jnp.where(valid, diff, -jnp.inf))
    quad = ((pred - gt) ** 2 + threshold ** 2) / (2 * threshold + eps)
    val = jnp.where(diff > threshold, quad, diff)
    val = jnp.where(valid, val, 0.0)
    return jnp.sum(val) / jnp.sum(valid)


if __name__ == "__main__":
    key = jax.random.PRNGKey(0)

    def make_inputs(shape, k):
        k1, k2 = jax.random.split(k)
        pred = jax.random.uniform(k1, shape, jnp.float32, 0.0, 2.0)
        gt = jax.random.uniform(k2, shape, jnp.float32, -0.5, 2.0)
        # Clamp some gt values to 0 so the (gt > eps) mask is exercised.
        gt = jnp.where(gt < 0.0, 0.0, gt)
        return pred, gt

    k1, k2 = jax.random.split(key)

    # Small NCHW case: single full-array block, grid (2, 1).
    pred, gt = make_inputs((2, 4, 16, 16), k1)
    loss = jax.block_until_ready(berhu_loss(pred, gt))
    ref = jax.block_until_ready(_berhu_loss_ref(pred, gt))
    assert jnp.allclose(loss, ref, rtol=1e-4, atol=1e-6), (loss, ref)

    # Larger case with a small tile to exercise multi-tile accumulation and
    # the ragged last block (2304 rows / 512-row tiles -> 5 tiles, last partial).
    pred2, gt2 = make_inputs((2, 8, 144, 128), k2)
    loss2 = jax.block_until_ready(berhu_loss(pred2, gt2, tile_rows=512))
    ref2 = jax.block_until_ready(_berhu_loss_ref(pred2, gt2))
    assert jnp.allclose(loss2, ref2, rtol=1e-4, atol=1e-6), (loss2, ref2)

    print("KERNEL_OK")
</pallas_src>

<mosaic_0001>
module attributes {stable_mosaic.version = 11 : i64} {
  func.func @_berhu_kernel(%arg0: i32, %arg1: i32, %arg2: memref<16x128xf32, #tpu.memory_space<vmem>>, %arg3: memref<16x128xf32, #tpu.memory_space<vmem>>, %arg4: memref<1xf32, #tpu.memory_space<smem>>, %arg5: memref<1x128xf32, #tpu.memory_space<vmem>>, %arg6: memref<1x128xf32, #tpu.memory_space<vmem>>, %arg7: memref<1x128xi32, #tpu.memory_space<vmem>>, %arg8: memref<1xf32, #tpu.memory_space<smem>>) attributes {dimension_semantics = [#tpu.dimension_semantics<arbitrary>, #tpu.dimension_semantics<arbitrary>], iteration_bounds = array<i64: 2, 1>, scalar_prefetch = 0 : i64, scratch_operands = 4 : i64, tpu.core_type = #tpu.core_type<tc>, window_params = [{transform_indices = @transform_0, window_bounds = array<i64: 16, 128>}, {transform_indices = @transform_1, window_bounds = array<i64: 16, 128>}, {transform_indices = @transform_2, window_bounds = array<i64: 1>}]} {
    %c0 = arith.constant 0 : index
    %c0_0 = arith.constant 0 : index
    %0 = vector.load %arg2[%c0, %c0_0] : memref<16x128xf32, #tpu.memory_space<vmem>>, vector<16x128xf32>
    %c0_1 = arith.constant 0 : index
    %c0_2 = arith.constant 0 : index
    %1 = vector.load %arg3[%c0_1, %c0_2] : memref<16x128xf32, #tpu.memory_space<vmem>>, vector<16x128xf32>
    %cst = arith.constant 9.99999974E-6 : f32
    %2 = vector.broadcast %cst : f32 to vector<16x128xf32>
    %3 = arith.cmpf ogt, %1, %2 : vector<16x128xf32>
    %4 = arith.subf %0, %1 : vector<16x128xf32>
    %5 = math.absf %4 : vector<16x128xf32>
    %c0_i32 = arith.constant 0 : i32
    %6 = arith.cmpi eq, %arg0, %c0_i32 : i32
    %c0_i32_3 = arith.constant 0 : i32
    %7 = arith.cmpi eq, %arg1, %c0_i32_3 : i32
    %8 = arith.andi %6, %7 : i1
    %9 = arith.extui %8 : i1 to i32
    %c0_i32_4 = arith.constant 0 : i32
    %10 = arith.cmpi ne, %9, %c0_i32_4 : i32
    scf.if %10 {
      %cst_14 = arith.constant 0.000000e+00 : f32
      %27 = vector.broadcast %cst_14 : f32 to vector<1x128xf32>
      %c0_15 = arith.constant 0 : index
      %c0_16 = arith.constant 0 : index
      %28 = vector.load %arg5[%c0_15, %c0_16] : memref<1x128xf32, #tpu.memory_space<vmem>>, vector<1x128xf32>
      tpu.vector_store %arg5[%c0_15, %c0_16], %27 {strides = array<i32>} : memref<1x128xf32, #tpu.memory_space<vmem>>, vector<1x128xf32>,
      %cst_17 = arith.constant 0.000000e+00 : f32
      %29 = vector.broadcast %cst_17 : f32 to vector<1x128xf32>
      %c0_18 = arith.constant 0 : index
      %c0_19 = arith.constant 0 : index
      %30 = vector.load %arg6[%c0_18, %c0_19] : memref<1x128xf32, #tpu.memory_space<vmem>>, vector<1x128xf32>
      tpu.vector_store %arg6[%c0_18, %c0_19], %29 {strides = array<i32>} : memref<1x128xf32, #tpu.memory_space<vmem>>, vector<1x128xf32>,
      %c0_i32_20 = arith.constant 0 : i32
      %31 = vector.broadcast %c0_i32_20 : i32 to vector<1x128xi32>
      %c0_21 = arith.constant 0 : index
      %c0_22 = arith.constant 0 : index
      %32 = vector.load %arg7[%c0_21, %c0_22] : memref<1x128xi32, #tpu.memory_space<vmem>>, vector<1x128xi32>
      tpu.vector_store %arg7[%c0_21, %c0_22], %31 {strides = array<i32>} : memref<1x128xi32, #tpu.memory_space<vmem>>, vector<1x128xi32>,
    } else {
    }
    %c0_i32_5 = arith.constant 0 : i32
    %11 = arith.cmpi eq, %arg0, %c0_i32_5 : i32
    %12 = arith.extui %11 : i1 to i32
    %c0_i32_6 = arith.constant 0 : i32
    %13 = arith.cmpi ne, %12, %c0_i32_6 : i32
    scf.if %13 {
      %cst_14 = arith.constant 0.000000e+00 : f32
      %27 = vector.broadcast %cst_14 : f32 to vector<16x128xf32>
      %28 = arith.select %3, %5, %27 : vector<16x128xi1>, vector<16x128xf32>
      %c0_15 = arith.constant 0 : index
      %c0_16 = arith.constant 0 : index
      %29 = vector.load %arg5[%c0_15, %c0_16] : memref<1x128xf32, #tpu.memory_space<vmem>>, vector<1x128xf32>
      %cst_17 = arith.constant dense<0xFF800000> : vector<128xf32>
      %30 = vector.multi_reduction <maximumf>, %28, %cst_17 [0] : vector<16x128xf32> to vector<128xf32>
      %31 = vector.shape_cast %30 : vector<128xf32> to vector<1x128xf32>
      %32 = arith.maximumf %29, %31 : vector<1x128xf32>
      %c0_18 = arith.constant 0 : index
      %c0_19 = arith.constant 0 : index
      %33 = vector.load %arg5[%c0_18, %c0_19] : memref<1x128xf32, #tpu.memory_space<vmem>>, vector<1x128xf32>
      tpu.vector_store %arg5[%c0_18, %c0_19], %32 {strides = array<i32>} : memref<1x128xf32, #tpu.memory_space<vmem>>, vector<1x128xf32>,
      %c0_20 = arith.constant 0 : index
      %c0_21 = arith.constant 0 : index
      %34 = vector.load %arg7[%c0_20, %c0_21] : memref<1x128xi32, #tpu.memory_space<vmem>>, vector<1x128xi32>
      %35 = arith.extui %3 : vector<16x128xi1> to vector<16x128xi32>
      %cst_22 = arith.constant dense<0> : vector<128xi32>
      %36 = vector.multi_reduction <add>, %35, %cst_22 [0] : vector<16x128xi32> to vector<128xi32>
      %37 = vector.shape_cast %36 : vector<128xi32> to vector<1x128xi32>
      %38 = arith.addi %34, %37 : vector<1x128xi32>
      %c0_23 = arith.constant 0 : index
      %c0_24 = arith.constant 0 : index
      %39 = vector.load %arg7[%c0_23, %c0_24] : memref<1x128xi32, #tpu.memory_space<vmem>>, vector<1x128xi32>
      tpu.vector_store %arg7[%c0_23, %c0_24], %38 {strides = array<i32>} : memref<1x128xi32, #tpu.memory_space<vmem>>, vector<1x128xi32>,
    } else {
    }
    %c0_i32_7 = arith.constant 0 : i32
    %14 = arith.cmpi eq, %arg0, %c0_i32_7 : i32
    %c0_i32_8 = arith.constant 0 : i32
    %15 = arith.cmpi eq, %arg1, %c0_i32_8 : i32
    %16 = arith.andi %14, %15 : i1
    %17 = arith.extui %16 : i1 to i32
    %c0_i32_9 = arith.constant 0 : i32
    %18 = arith.cmpi ne, %17, %c0_i32_9 : i32
    scf.if %18 {
      %c0_14 = arith.constant 0 : index
      %c0_15 = arith.constant 0 : index
      %27 = vector.load %arg5[%c0_14, %c0_15] : memref<1x128xf32, #tpu.memory_space<vmem>>, vector<1x128xf32>
      %28 = vector.shape_cast %27 : vector<1x128xf32> to vector<1x1x128xf32>
      %cst_16 = arith.constant dense<0xFF800000> : vector<1xf32>
      %29 = vector.multi_reduction <maximumf>, %28, %cst_16 [1, 2] : vector<1x1x128xf32> to vector<1xf32>
      %30 = vector.shape_cast %29 : vector<1xf32> to vector<1x1x1xf32>
      %31 = vector.extract %30[0, 0, 0] : f32 from vector<1x1x1xf32>
      %cst_17 = arith.constant 5.000000e-01 : f32
      %32 = arith.mulf %cst_17, %31 : f32
      %c0_18 = arith.constant 0 : index
      %33 = memref.load %arg8[%c0_18] : memref<1xf32, #tpu.memory_space<smem>>
      memref.store %32, %arg8[%c0_18] : memref<1xf32, #tpu.memory_space<smem>>
    } else {
    }
    %c1_i32 = arith.constant 1 : i32
    %19 = arith.cmpi eq, %arg0, %c1_i32 : i32
    %20 = arith.extui %19 : i1 to i32
    %c0_i32_10 = arith.constant 0 : i32
    %21 = arith.cmpi ne, %20, %c0_i32_10 : i32
    scf.if %21 {
      %c0_14 = arith.constant 0 : index
      %27 = memref.load %arg8[%c0_14] : memref<1xf32, #tpu.memory_space<smem>>
      %28 = arith.mulf %27, %27 : f32
      %cst_15 = arith.constant 2.000000e+00 : f32
      %29 = arith.mulf %cst_15, %27 : f32
      %cst_16 = arith.constant 9.99999974E-6 : f32
      %30 = arith.addf %29, %cst_16 : f32
      %cst_17 = arith.constant 1.000000e+00 : f32
      %31 = arith.divf %cst_17, %30 : f32
      %32 = arith.mulf %5, %5 : vector<16x128xf32>
      %33 = vector.broadcast %28 : f32 to vector<16x128xf32>
      %34 = arith.addf %32, %33 : vector<16x128xf32>
      %35 = vector.broadcast %31 : f32 to vector<16x128xf32>
      %36 = arith.mulf %34, %35 : vector<16x128xf32>
      %37 = vector.broadcast %27 : f32 to vector<16x128xf32>
      %38 = arith.cmpf ogt, %5, %37 : vector<16x128xf32>
      %39 = arith.select %38, %36, %5 : vector<16x128xi1>, vector<16x128xf32>
      %cst_18 = arith.constant 0.000000e+00 : f32
      %40 = vector.broadcast %cst_18 : f32 to vector<16x128xf32>
      %41 = arith.select %3, %39, %40 : vector<16x128xi1>, vector<16x128xf32>
      %c0_19 = arith.constant 0 : index
      %c0_20 = arith.constant 0 : index
      %42 = vector.load %arg6[%c0_19, %c0_20] : memref<1x128xf32, #tpu.memory_space<vmem>>, vector<1x128xf32>
      %cst_21 = arith.constant dense<0.000000e+00> : vector<128xf32>
      %43 = vector.multi_reduction <add>, %41, %cst_21 [0] : vector<16x128xf32> to vector<128xf32>
      %44 = vector.shape_cast %43 : vector<128xf32> to vector<1x128xf32>
      %45 = arith.addf %42, %44 : vector<1x128xf32>
      %c0_22 = arith.constant 0 : index
      %c0_23 = arith.constant 0 : index
      %46 = vector.load %arg6[%c0_22, %c0_23] : memref<1x128xf32, #tpu.memory_space<vmem>>, vector<1x128xf32>
      tpu.vector_store %arg6[%c0_22, %c0_23], %45 {strides = array<i32>} : memref<1x128xf32, #tpu.memory_space<vmem>>, vector<1x128xf32>,
    } else {
    }
    %c1_i32_11 = arith.constant 1 : i32
    %22 = arith.cmpi eq, %arg0, %c1_i32_11 : i32
    %c0_i32_12 = arith.constant 0 : i32
    %23 = arith.cmpi eq, %arg1, %c0_i32_12 : i32
    %24 = arith.andi %22, %23 : i1
    %25 = arith.extui %24 : i1 to i32
    %c0_i32_13 = arith.constant 0 : i32
    %26 = arith.cmpi ne, %25, %c0_i32_13 : i32
    scf.if %26 {
      %c0_14 = arith.constant 0 : index
      %c0_15 = arith.constant 0 : index
      %27 = vector.load %arg6[%c0_14, %c0_15] : memref<1x128xf32, #tpu.memory_space<vmem>>, vector<1x128xf32>
      %28 = vector.shape_cast %27 : vector<1x128xf32> to vector<1x1x128xf32>
      %cst_16 = arith.constant dense<0.000000e+00> : vector<1xf32>
      %29 = vector.multi_reduction <add>, %28, %cst_16 [1, 2] : vector<1x1x128xf32> to vector<1xf32>
      %30 = vector.shape_cast %29 : vector<1xf32> to vector<1x1x1xf32>
      %31 = vector.extract %30[0, 0, 0] : f32 from vector<1x1x1xf32>
      %c0_17 = arith.constant 0 : index
      %c0_18 = arith.constant 0 : index
      %32 = vector.load %arg7[%c0_17, %c0_18] : memref<1x128xi32, #tpu.memory_space<vmem>>, vector<1x128xi32>
      %33 = vector.shape_cast %32 : vector<1x128xi32> to vector<1x1x128xi32>
      %cst_19 = arith.constant dense<0> : vector<1xi32>
      %34 = vector.multi_reduction <add>, %33, %cst_19 [1, 2] : vector<1x1x128xi32> to vector<1xi32>
      %35 = vector.shape_cast %34 : vector<1xi32> to vector<1x1x1xi32>
      %36 = vector.extract %35[0, 0, 0] : i32 from vector<1x1x1xi32>
      %37 = arith.sitofp %36 : i32 to f32
      %38 = arith.divf %31, %37 : f32
      %c0_20 = arith.constant 0 : index
      %39 = memref.load %arg4[%c0_20] : memref<1xf32, #tpu.memory_space<smem>>
      memref.store %38, %arg4[%c0_20] : memref<1xf32, #tpu.memory_space<smem>>
    } else {
    }
    return
  }
  func.func @transform_0(%arg0: i32, %arg1: i32) -> (i32, i32) {
    %c0_i32 = arith.constant 0 : i32
    %c0_i32_0 = arith.constant 0 : i32
    return %arg1, %c0_i32 : i32, i32
  }
  func.func @transform_1(%arg0: i32, %arg1: i32) -> (i32, i32) {
    %c0_i32 = arith.constant 0 : i32
    %c0_i32_0 = arith.constant 0 : i32
    return %arg1, %c0_i32 : i32, i32
  }
  func.func @transform_2(%arg0: i32, %arg1: i32) -> i32 {
    %c0_i32 = arith.constant 0 : i32
    %c0_i32_0 = arith.constant 0 : i32
    return %c0_i32 : i32
  }
}

</mosaic_0001>

<llo_original>
// kernel: tpu_custom_call.1
$region0: #{tpu_custom_call.1}
  #allocation0 [shape = 'u32[]', space=smem, size = 0x4, offset = 0x4, fixed_abs, tag = 'smem constant byte address 0x4 - core index']
  #allocation1 [shape = 'u32[144,128]{1,0:T(1,128)}', space=vmem, size = 0x12000, scoped, tag = 'internal scratch']
  #allocation2 [shape = 'f32[1,128]{1,0:T(1,128)}', space=vmem, size = 0x200, scoped, tag = 'scratch operand']
  #allocation3 [shape = 'f32[1,128]{1,0:T(1,128)}', space=vmem, size = 0x200, scoped, tag = 'scratch operand']
  #allocation4 [shape = 's32[1,128]{1,0:T(1,128)}', space=vmem, size = 0x200, scoped, tag = 'scratch operand']
  #allocation5 [shape = 'f32[1]{0:T(128)}', space=smem, size = 0x200, scoped, tag = 'scratch operand']
  %s0 = inlined_call_operand.hbm [shape: f32[16,128], index: 0, kind: input, shape index: {}]
  %s1 = inlined_call_operand.hbm [shape: f32[16,128], index: 1, kind: input, shape index: {}]
  %s2 = inlined_call_operand.hbm [shape: f32[1], index: 2, kind: output, shape index: {}]
  %s3 = sld [smem:[#allocation0]]
  $region69: #{tpu_custom_call.1} parent=0
    _
  %s5 = ssub.s32 1, %s3
  %s6 = scalar_select 0, %s5, %s3
  $region1: #{tpu_custom_call.1} parent=0
    #allocation6 [shape = 'u8[8192]{0}', space=vmem, size = 0x2000, scoped, tag = 'input window, operand 0, single buffered']
    #allocation7 [shape = 's32[2]{0}', space=sflag, size = 0x8, scoped, tag = 'scoped memory for tpu_custom_call.1']
    #allocation8 [shape = 's32[2]{0}', space=sflag, size = 0x8, scoped, tag = 'scoped memory for tpu_custom_call.1']
    #allocation9 [shape = 'u8[8192]{0}', space=vmem, size = 0x2000, scoped, tag = 'input window, operand 1, single buffered']
    #allocation10 [shape = 's32[1]{0}', space=sflag, size = 0x4, scoped, tag = 'scoped memory for tpu_custom_call.1']
    #allocation11 [shape = 'u8[512]{0}', space=smem, size = 0x200, scoped, tag = 'output window, operand 0, single buffered']
    %7 = vsyncpa [#allocation7], 0
    %8 = vsyncpa [#allocation10], 0
    %9 = vsyncpa [#allocation8], 0
    loop: start=0, step=1, limit=4
    $region2: #{tpu_custom_call.1} parent=1 // loop_pre_header
      _
    $region3: #{tpu_custom_call.1} parent=1 // loop_header
      %s11 = sphi 0, %s15
      %p12 = scmp.ge.s32.totalorder %s11, 4
      %s18 = sphi 0, %s30
      %s19 = sphi 0, %s26
      %s20 = sphi 0, %s18
      %s21 = sphi 0, %s19
      %s22 = sphi 0, %s20
      %s23 = sphi 0, %s21
      %s33 = sphi 0, %s35
      %s36 = sphi 0, %s33
      %s37 = sphi 0, %s36
      %s53 = sphi 0, %s37
      %s59 = sphi 0, %s61
      %s62 = sphi 0, %s59
      %s63 = sphi 0, %s62
      %s79 = sphi 0, %s63
      %s83 = sphi 0, %s83
      %s85 = sphi 0, %s83
      %s86 = sphi 0, %s85
      %s100 = sphi 0, %s86
    $region4: #{tpu_custom_call.1} parent=1 // loop_header_branch
      %14 = sbr.rel (%p12) target = $region8
    $region5: #{tpu_custom_call.1} parent=1 // loop_body
      %s16 = ssub.s32 %s11, 1
      %s17 = ssub.s32 %s11, 2
      %s24 = sadd.s32 1, %s19
      %p25 = scmp.ge.s32.totalorder %s24, 1
      %s26 = scalar_select %p25, 0, %s24
      %s27 = sadd.s32 1, %s18
      %s28 = scalar_select %p25, %s27, %s18
      %p29 = scmp.ge.s32.totalorder %s28, 2
      %s30 = scalar_select %p29, 0, %s28
      %s31 = ssub.s32 %s19, %s26
      %p32 = scmp.eq.s32.totalorder %s31, 0
      %s34 = sadd.s32 %s33, 1
      %s35 = scalar_select %p32, %s33, %s34
      %p38 = pneg %p32
      %p39 = scmp.eq.s32.totalorder %s11, 1
      %p40 = por %p38, %p39
      %p41 = scmp.ne.s32.totalorder %s33, %s36
      %p42 = scmp.eq.s32.totalorder %s11, 0
      %p43 = por %p41, %p42
      %p44 = scmp.ne.s32.totalorder %s33, %s36
      %p45 = scmp.eq.s32.totalorder %s16, 1
      %p46 = por %p44, %p45
      %p47 = scmp.ne.s32.totalorder %s36, %s37
      %p48 = scmp.eq.s32.totalorder %s16, 0
      %p49 = por %p47, %p48
      %p50 = scmp.ne.s32.totalorder %s36, %s37
      %p51 = scmp.eq.s32.totalorder %s17, 1
      %p52 = por %p50, %p51
      %p54 = scmp.ne.s32.totalorder %s37, %s53
      %p55 = scmp.eq.s32.totalorder %s17, 0
      %p56 = por %p54, %p55
      %s57 = ssub.s32 %s19, %s26
      %p58 = scmp.eq.s32.totalorder %s57, 0
      %s60 = sadd.s32 %s59, 1
      %s61 = scalar_select %p58, %s59, %s60
      %p64 = pneg %p58
      %p65 = scmp.eq.s32.totalorder %s11, 1
      %p66 = por %p64, %p65
      %p67 = scmp.ne.s32.totalorder %s59, %s62
      %p68 = scmp.eq.s32.totalorder %s11, 0
      %p69 = por %p67, %p68
      %p70 = scmp.ne.s32.totalorder %s59, %s62
      %p71 = scmp.eq.s32.totalorder %s16, 1
      %p72 = por %p70, %p71
      %p73 = scmp.ne.s32.totalorder %s62, %s63
      %p74 = scmp.eq.s32.totalorder %s16, 0
      %p75 = por %p73, %p74
      %p76 = scmp.ne.s32.totalorder %s62, %s63
      %p77 = scmp.eq.s32.totalorder %s17, 1
      %p78 = por %p76, %p77
      %p80 = scmp.ne.s32.totalorder %s63, %s79
      %p81 = scmp.eq.s32.totalorder %s17, 0
      %p82 = por %p80, %p81
      %s84 = sadd.s32 %s83, 1
      %p87 = scmp.eq.s32.totalorder %s11, 1
      %p88 = scmp.ne.s32.totalorder %s83, %s85
      %p89 = scmp.eq.s32.totalorder %s11, 0
      %p90 = por %p88, %p89
      %p91 = scmp.ne.s32.totalorder %s83, %s85
      %p92 = scmp.eq.s32.totalorder %s16, 1
      %p93 = por %p91, %p92
      %p94 = scmp.ne.s32.totalorder %s85, %s86
      %p95 = scmp.eq.s32.totalorder %s16, 0
      %p96 = por %p94, %p95
      %p97 = scmp.ne.s32.totalorder %s85, %s86
      %p98 = scmp.eq.s32.totalorder %s17, 1
      %p99 = por %p97, %p98
      %p101 = scmp.ne.s32.totalorder %s86, %s100
      %p102 = scmp.eq.s32.totalorder %s17, 0
      %p103 = por %p101, %p102
      %p104 = scmp.le.s32.totalorder 1, %s11
      %p105 = scmp.lt.s32.totalorder %s11, 3
      %p106 = pnand %p104, %p105
      %p107 = pneg %p106
      // Predicated region
      $region9: #{tpu_custom_call.1} parent=5 // pred_check
        _
      $region10: #{tpu_custom_call.1} parent=5 // pred_check_branch
        %109 = sbr.rel (%p106) target = $region12
      $region11: #{tpu_custom_call.1} parent=5 // pred_region
        %s110 = ssub.s32 %s11, 1
        // Predicated region
        $region13: #{tpu_custom_call.1} parent=11 // pred_check
          %p111 = pneg %p49
        $region14: #{tpu_custom_call.1} parent=11 // pred_check_branch
          %113 = sbr.rel (%p111) target = $region16
        $region15: #{tpu_custom_call.1} parent=11 // pred_region
          %s114 = smul.u32 2, %s21
          %s116 = ssub.s32 256, 256
          %117 = vsyncadd [#allocation7], %s116
          %s118 = smul.addr %s114, 128
          %s119 = scalar_lea.hbm %s0, %s118
          %s120 = sshll.u32 [#allocation6], 4
          %s121 = int_to_ptr.vmem [resolvable:$true] %s120
          %126 = dma.hbm_to_vmem [thread:$0]  %s119, 256, %s121, [#allocation7], 128, 128, 8
        $region16: #{tpu_custom_call.1} parent=11 // pred_fallthru
          _
        // Predicated region
        $region17: #{tpu_custom_call.1} parent=11 // pred_check
          %p127 = pneg %p75
        $region18: #{tpu_custom_call.1} parent=11 // pred_check_branch
          %129 = sbr.rel (%p127) target = $region20
        $region19: #{tpu_custom_call.1} parent=11 // pred_region
          %s130 = smul.u32 2, %s21
          %s132 = ssub.s32 256, 256
          %133 = vsyncadd [#allocation10], %s132
          %s134 = smul.addr %s130, 128
          %s135 = scalar_lea.hbm %s1, %s134
          %s136 = sshll.u32 [#allocation9], 4
          %s137 = int_to_ptr.vmem [resolvable:$true] %s136
          %142 = dma.hbm_to_vmem [thread:$0]  %s135, 256, %s137, [#allocation10], 128, 128, 8
        $region20: #{tpu_custom_call.1} parent=11 // pred_fallthru
          _
      $region12: #{tpu_custom_call.1} parent=5 // pred_fallthru
        _
      %p143 = scmp.lt.s32.totalorder %s11, 2
      // Predicated region
      $region21: #{tpu_custom_call.1} parent=5 // pred_check
        %p144 = pneg %p143
      $region22: #{tpu_custom_call.1} parent=5 // pred_check_branch
        %146 = sbr.rel (%p144) target = $region24
      $region23: #{tpu_custom_call.1} parent=5 // pred_region
        _
      $region24: #{tpu_custom_call.1} parent=5 // pred_fallthru
        _
      %p147 = scmp.le.s32.totalorder 1, %s11
      %p148 = scmp.lt.s32.totalorder %s11, 3
      %p149 = pnand %p147, %p148
      %p150 = pneg %p149
      // Predicated region
      $region25: #{tpu_custom_call.1} parent=5 // pred_check
        _
      $region26: #{tpu_custom_call.1} parent=5 // pred_check_branch
        %152 = sbr.rel (%p149) target = $region28
      $region27: #{tpu_custom_call.1} parent=5 // pred_region
        %s153 = ssub.s32 %s11, 1
        // Predicated region
        $region29: #{tpu_custom_call.1} parent=27 // pred_check
          %p154 = pneg %p49
        $region30: #{tpu_custom_call.1} parent=27 // pred_check_branch
          %156 = sbr.rel (%p154) target = $region32
        $region31: #{tpu_custom_call.1} parent=27 // pred_region
          %157 = dma.done [#allocation7], 256
        $region32: #{tpu_custom_call.1} parent=27 // pred_fallthru
          _
        // Predicated region
        $region33: #{tpu_custom_call.1} parent=27 // pred_check
          %p158 = pneg %p75
        $region34: #{tpu_custom_call.1} parent=27 // pred_check_branch
          %160 = sbr.rel (%p158) target = $region36
        $region35: #{tpu_custom_call.1} parent=27 // pred_region
          %161 = dma.done [#allocation10], 256
        $region36: #{tpu_custom_call.1} parent=27 // pred_fallthru
          _
        %p162 = pneg %p49
        %p163 = pneg %p46
        %p164 = pneg %p75
        %p165 = pneg %p72
        %p166 = pneg %p96
        %p167 = pneg %p93
        %s168 = smul.u32 2, %s21
        %s169 = smul.u32 2, %s21
        %v170 = vld [vmem:[#allocation6] sm:$0xff]
        %v171 = vld [vmem:[#allocation6 + $0x8] sm:$0xff]
        %v172 = vld [vmem:[#allocation9] sm:$0xff]
        %v173 = vld [vmem:[#allocation9 + $0x8] sm:$0xff]
        %vm174 = vcmp.gt.f32.partialorder %v172, 1e-05
        %vm175 = vcmp.gt.f32.partialorder %v173, 1e-05
        %v176 = vsub.f32 %v170, %v172
        %v177 = vsub.f32 %v171, %v173
        %v178 = vand.u32 2147483647, %v176
        %v179 = vand.u32 2147483647, %v177
        %p180 = scmp.eq.s32.totalorder %s20, 0
        %p181 = scmp.eq.s32.totalorder %s21, 0
        %p182 = pnand %p180, %p181
        %p183 = pneg %p182
        // Predicated region
        $region37: #{tpu_custom_call.1} parent=27 // pred_check
          _
        $region38: #{tpu_custom_call.1} parent=27 // pred_check_branch
          %185 = sbr.rel (%p182) target = $region40
        $region39: #{tpu_custom_call.1} parent=27 // pred_region
          %186 = vst [vmem:[#allocation2] sm:$0x1] 0.0
          %187 = vst [vmem:[#allocation3] sm:$0x1] 0.0
          %188 = vst [vmem:[#allocation4] sm:$0x1] 0
        $region40: #{tpu_custom_call.1} parent=27 // pred_fallthru
          _
        // Predicated region
        $region41: #{tpu_custom_call.1} parent=27 // pred_check
          %p189 = pneg %p180
        $region42: #{tpu_custom_call.1} parent=27 // pred_check_branch
          %191 = sbr.rel (%p189) target = $region44
        $region43: #{tpu_custom_call.1} parent=27 // pred_region
          %v192 = vsel %vm174, %v178, 0.0
          %v193 = vsel %vm175, %v179, 0.0
          %v194 = vld [vmem:[#allocation2] sm:$0x1]
          %v195 = vmax.f32 %v192, %v193
          %v196 = vrot.slane %v195, 4
          %v197 = vmax.f32 %v195, %v196
          %v198 = vrot.slane %v197, 2
          %v199 = vmax.f32 %v197, %v198
          %v200 = vrot.slane %v199, 1
          %v201 = vmax.f32 %v199, %v200
          %v202 = vmax.f32 %v194, %v201
          %203 = vst [vmem:[#allocation2] sm:$0x1] %v202
          %v204 = vld [vmem:[#allocation4] sm:$0x1]
          %v205 = vsel %vm174, 1, 0
          %v206 = vsel %vm175, 1, 0
          %v207 = vadd.s32 %v205, %v206
          %v208 = vrot.slane %v207, 4
          %v209 = vadd.s32 %v207, %v208
          %v210 = vrot.slane %v209, 2
          %v211 = vadd.s32 %v209, %v210
          %v212 = vrot.slane %v211, 1
          %v213 = vadd.s32 %v211, %v212
          %v214 = vadd.s32 %v204, %v213
          %215 = vst [vmem:[#allocation4] sm:$0x1] %v214
        $region44: #{tpu_custom_call.1} parent=27 // pred_fallthru
          _
        // Predicated region
        $region45: #{tpu_custom_call.1} parent=27 // pred_check
          _
        $region46: #{tpu_custom_call.1} parent=27 // pred_check_branch
          %217 = sbr.rel (%p182) target = $region48
        $region47: #{tpu_custom_call.1} parent=27 // pred_region
          %v218 = vld [vmem:[#allocation2] sm:$0x1]
          %vm219 = vcmask 1040384
          %v220 = vsel %vm219, %v218, -inf
          %221 = vmax.xlane.f32.xlu0 %v220
          %v222 = vpop.xlane.xlu0 %221
          %v223 = vrot.slane %v222, 4
          %v224 = vmax.f32 %v222, %v223
          %v225 = vrot.slane %v224, 2
          %v226 = vmax.f32 %v224, %v225
          %v227 = vrot.slane %v226, 1
          %v228 = vmax.f32 %v226, %v227
          %s229 = vtos %v228
          %s230 = smul.f32 %s229, 0.5
          %s231 = scalar_lea.smem [#allocation5], 0
          %232 = sst [smem:[%s231]] %s230
        $region48: #{tpu_custom_call.1} parent=27 // pred_fallthru
          _
        %p233 = scmp.eq.s32.totalorder %s20, 1
        // Predicated region
        $region49: #{tpu_custom_call.1} parent=27 // pred_check
          %p234 = pneg %p233
        $region50: #{tpu_custom_call.1} parent=27 // pred_check_branch
          %236 = sbr.rel (%p234) target = $region52
        $region51: #{tpu_custom_call.1} parent=27 // pred_region
          %s237 = sld [smem:[#allocation5]]
          %s238 = smul.f32 %s237, %s237
          %s239 = smul.f32 %s237, 2.0
          %s240 = sadd.f32 %s239, 1e-05
          %v241 = vstv %s240
          %v242 = vrcp.pop %v241
          %s243 = vtos %v242
          %v244 = vmul.f32 %v178, %v178
          %v245 = vmul.f32 %v179, %v179
          %v246 = vstv %s238
          %v247 = vadd.f32 %v244, %v246
          %v248 = vadd.f32 %v245, %v246
          %v249 = vstv %s243
          %v250 = vmul.f32 %v247, %v249
          %v251 = vmul.f32 %v248, %v249
          %v252 = vstv %s237
          %vm253 = vcmp.gt.f32.partialorder %v178, %v252
          %vm254 = vcmp.gt.f32.partialorder %v179, %v252
          %v255 = vsel %vm253, %v250, %v178
          %v256 = vsel %vm254, %v251, %v179
          %v257 = vsel %vm174, %v255, 0.0
          %v258 = vsel %vm175, %v256, 0.0
          %v259 = vld [vmem:[#allocation3] sm:$0x1]
          %v260 = vadd.f32 %v257, %v258
          %v261 = vrot.slane %v260, 4
          %v262 = vadd.f32 %v260, %v261
          %v263 = vrot.slane %v262, 2
          %v264 = vadd.f32 %v262, %v263
          %v265 = vrot.slane %v264, 1
          %v266 = vadd.f32 %v264, %v265
          %v267 = vadd.f32 %v259, %v266
          %268 = vst [vmem:[#allocation3] sm:$0x1] %v267
        $region52: #{tpu_custom_call.1} parent=27 // pred_fallthru
          _
        %p269 = pnand %p233, %p181
        %p270 = pneg %p269
        // Predicated region
        $region53: #{tpu_custom_call.1} parent=27 // pred_check
          _
        $region54: #{tpu_custom_call.1} parent=27 // pred_check_branch
          %272 = sbr.rel (%p269) target = $region56
        $region55: #{tpu_custom_call.1} parent=27 // pred_region
          %v273 = vld [vmem:[#allocation3] sm:$0x1]
          %vm274 = vcmask 1040384
          %v275 = vsel %vm274, %v273, 0.0
          %276 = vadd.xlane.f32.xlu0 %v275
          %v277 = vpop.xlane.xlu0 %276
          %v278 = vrot.slane %v277, 4
          %v279 = vadd.f32 %v277, %v278
          %v280 = vrot.slane %v279, 2
          %v281 = vadd.f32 %v279, %v280
          %v282 = vrot.slane %v281, 1
          %v283 = vadd.f32 %v281, %v282
          %s284 = vtos %v283
          %v285 = vld [vmem:[#allocation4] sm:$0x1]
          %v286 = vsel %vm274, %v285, 0
          %v287 = vand.u32 %v286, 65535
          %v288 = vshrl.u32 %v286, 16
          %v289 = vcvt.s32.f32 %v287
          %v290 = vcvt.s32.f32 %v288
          %291 = vadd.xlane.f32.xlu0 %v289
          %v292 = vpop.xlane.xlu0 %291
          %293 = vadd.xlane.f32.xlu0 %v290
          %v294 = vpop.xlane.xlu0 %293
          %v295 = vcvt.f32.s32 %v292
          %v296 = vcvt.f32.s32 %v294
          %v297 = vshll.u32 %v296, 16
          %v298 = vadd.s32 %v297, %v295
          %v299 = vrot.slane %v298, 4
          %v300 = vadd.s32 %v298, %v299
          %v301 = vrot.slane %v300, 2
          %v302 = vadd.s32 %v300, %v301
          %v303 = vrot.slane %v302, 1
          %v304 = vadd.s32 %v302, %v303
          %s305 = vtos %v304
          %s306 = scvt.s32.f32 %s305
          %v307 = vstv %s306
          %v308 = vrcp.pop %v307
          %s309 = vtos %v308
          %s310 = smul.f32 %s284, %s309
          %s311 = scalar_lea.smem [#allocation11], 0
          %312 = sst [smem:[%s311]] %s310
        $region56: #{tpu_custom_call.1} parent=27 // pred_fallthru
          _
        // Predicated region
        $region57: #{tpu_custom_call.1} parent=27 // pred_check
          %p313 = pneg %p93
        $region58: #{tpu_custom_call.1} parent=27 // pred_check_branch
          %315 = sbr.rel (%p313) target = $region60
        $region59: #{tpu_custom_call.1} parent=27 // pred_region
          %s317 = ssub.s32 16, 16
          %318 = vsyncadd [#allocation8], %s317
          %321 = dma.smem_to_hbm [#allocation11], 16, %s2, [#allocation8]
        $region60: #{tpu_custom_call.1} parent=27 // pred_fallthru
          _
        // Predicated region
        $region61: #{tpu_custom_call.1} parent=27 // pred_check
          %p322 = pneg %p93
        $region62: #{tpu_custom_call.1} parent=27 // pred_check_branch
          %324 = sbr.rel (%p322) target = $region64
        $region63: #{tpu_custom_call.1} parent=27 // pred_region
          %325 = dma.done [#allocation8], 16
        $region64: #{tpu_custom_call.1} parent=27 // pred_fallthru
          _
        %326 = sfence
      $region28: #{tpu_custom_call.1} parent=5 // pred_fallthru
        _
      %p327 = scmp.le.s32.totalorder 2, %s11
      // Predicated region
      $region65: #{tpu_custom_call.1} parent=5 // pred_check
        %p328 = pneg %p327
      $region66: #{tpu_custom_call.1} parent=5 // pred_check_branch
        %330 = sbr.rel (%p328) target = $region68
      $region67: #{tpu_custom_call.1} parent=5 // pred_region
        %s331 = ssub.s32 %s11, 2
      $region68: #{tpu_custom_call.1} parent=5 // pred_fallthru
        _
    $region6: #{tpu_custom_call.1} parent=1 // loop_footer
      %s15 = sadd.s32 1, %s11
    $region7: #{tpu_custom_call.1} parent=1 // loop_footer_branch
      %10 = sbr.rel target = $region3
    $region8: #{tpu_custom_call.1} parent=1 // loop_exit
      _
    %332 = vsyncpa [#allocation7], 1
    %s333 = scalar_lea.sflag [#allocation7], 1
    %334 = vsyncpa %s333, 1
    %335 = vsyncpa [#allocation10], 1
    %336 = vsyncpa [#allocation8], 1
    %s337 = scalar_lea.sflag [#allocation8], 1
    %338 = vsyncpa %s337, 1

</llo_original>
